<compile_context>
chip_gen: v7x
topology: tpu7x:2x2x1
jax: 0.10.0
libtpu: 0.0.40
codegen_flags: <defaults>
</compile_context>

<pallas_src>
import functools

import jax
import jax.numpy as jnp
from jax import lax
from jax.experimental import pallas as pl
from jax.experimental.pallas import tpu as pltpu

EPS = 1e-5


# ----------------------------------------------------------------------------
# Kernels
# ----------------------------------------------------------------------------
def _stats_kernel(x_ref, sum_ref, ssq_ref):
    """Two-pass path, pass 1: accumulate per-channel sum / sum(x^2).

    Grid = (channel tiles, batch tiles, spatial tiles); the two trailing axes
    are reductions, so the (c_tile, 1) output blocks stay VMEM-resident and
    are initialized once per channel tile via pl.when.  Zero-padded spatial
    lanes contribute 0 to both sums, so no masking is needed here.
    """
    n = pl.program_id(1)
    r = pl.program_id(2)

    @pl.when((n == 0) & (r == 0))
    def _():
        sum_ref[...] = jnp.zeros_like(sum_ref)
        ssq_ref[...] = jnp.zeros_like(ssq_ref)

    x = x_ref[...].astype(jnp.float32)            # (n_tile, c_tile, hw_tile)
    # Lane (XLU) reduction first, then cheap VPU adds over the batch axis.
    # TODO(synk): if a v7x bundle dump shows the XLU slot binding before HBM
    # bandwidth, offload the lane reduction to the idle MXU (x @ ones).
    sum_ref[...] += jnp.sum(jnp.sum(x, axis=2, keepdims=True), axis=0)
    ssq_ref[...] += jnp.sum(jnp.sum(x * x, axis=2, keepdims=True), axis=0)


def _norm_kernel(x_ref, s_ref, ss_ref, w_ref, b_ref, o_ref, *,
                 count, eps, compute_dtype):
    """Two-pass path, pass 2: finalize stats per channel tile (tiny, rsqrt on
    the EUP slot) and apply y = x * scale + shift in a single FMA/element."""
    inv_cnt = jnp.float32(1.0 / count)
    mean = s_ref[...] * inv_cnt                                  # (c_tile, 1)
    var = jnp.maximum(ss_ref[...] * inv_cnt - mean * mean, 0.0)  # biased var
    inv = lax.rsqrt(var + jnp.float32(eps))
    scale = w_ref[...].astype(jnp.float32) * inv
    shift = b_ref[...].astype(jnp.float32) - mean * scale
    scale = scale[None].astype(compute_dtype)                    # (1, c_tile, 1)
    shift = shift[None].astype(compute_dtype)
    x = x_ref[...].astype(compute_dtype)
    o_ref[...] = (x * scale + shift).astype(o_ref.dtype)


def _fused_kernel(x_ref, w_ref, b_ref, o_ref, *, count, hw_real, eps):
    """Fused single-read fast path: the whole (N, c_tile, HWpad) channel slab
    is VMEM resident, so stats + normalize need one HBM read + one write.
    Variance is mean-centred (numerically stabler than E[x^2]-E[x]^2), with
    zero-padded lanes masked out of the centred sum."""
    x = x_ref[...].astype(jnp.float32)            # (N, c_tile, HWpad)
    inv_cnt = jnp.float32(1.0 / count)
    s = jnp.sum(jnp.sum(x, axis=2, keepdims=True), axis=0)       # (c_tile, 1)
    mean = s * inv_cnt
    xc = x - mean[None]
    if hw_real != x.shape[-1]:                    # static (trace-time) branch
        lane = lax.broadcasted_iota(jnp.int32, x.shape, 2)
        xc = jnp.where(lane < hw_real, xc, 0.0)
    var = jnp.sum(jnp.sum(xc * xc, axis=2, keepdims=True), axis=0) * inv_cnt
    inv = lax.rsqrt(var + jnp.float32(eps))       # EUP slot
    scale = w_ref[...].astype(jnp.float32) * inv
    shift = b_ref[...].astype(jnp.float32) - mean * scale
    o_ref[...] = (x * scale[None] + shift[None]).astype(o_ref.dtype)


# ----------------------------------------------------------------------------
# Tiling / chip helpers
# ----------------------------------------------------------------------------
def _aligned_divisors(dim, align):
    """Multiples of `align` that divide `dim` (ascending).  Falls back to the
    full dim (block == array dim escape hatch) if `dim` is not aligned."""
    if dim % align != 0:
        return [dim]
    return [d for d in range(align, dim + 1, align) if dim % d == 0]


def _vmem_limit_bytes():
    """3/4 of physical VMEM: ~96 MiB on v5e/v6e, ~48 MiB on v7x."""
    try:
        cap = int(pltpu.get_tpu_info().vmem_capacity_bytes)
    except Exception:
        cap = 64 * 1024 * 1024          # conservative (v7x per-core) fallback
    return (cap * 3) // 4


def _compute_dtype_for(dtype):
    """bf16 math is native on v6e/v7x VPUs; keep the f32 path on v5 chips."""
    if jnp.dtype(dtype) != jnp.dtype(jnp.bfloat16):
        return jnp.float32
    try:
        if "v5" in jax.devices()[0].device_kind.lower():
            return jnp.float32
    except Exception:
        return jnp.float32
    return jnp.bfloat16


# ----------------------------------------------------------------------------
# Wrapper
# ----------------------------------------------------------------------------
def batch_tsa_up_forward(x_nchw, weight, bias, eps=EPS,
                         max_block_bytes=None, donate_input=False):
    """x_nchw: (N, C, H, W); weight/bias: (C,). Training-mode BatchNorm2d."""
    N, C, H, W = x_nchw.shape
    HW = H * W
    dtype = x_nchw.dtype
    elem_bytes = jnp.dtype(dtype).itemsize

    # Free view (N, C, H, W) -> (N, C, HW); pad spatial axis once to a lane
    # multiple so every block stays (8, 128)-aligned and lane-dense.
    HWp = ((HW + 127) // 128) * 128
    x = x_nchw.reshape(N, C, HW)
    if HWp != HW:
        x = jnp.pad(x, ((0, 0), (0, 0), (0, HWp - HW)))

    w2 = weight.reshape(C, 1)
    b2 = bias.reshape(C, 1)
    count = float(N * HW)                 # real element count (excludes pad)

    vmem_limit = _vmem_limit_bytes()
    # Per-block byte budget: ~4 pipelined buffers (2 in + 2 out) plus the
    # in-kernel f32 temporaries must stay well under the scoped VMEM limit.
    block_budget = max_block_bytes if max_block_bytes is not None else vmem_limit // 6
    eff_bytes = elem_bytes + 8            # raw block + f32 x / x^2 temporaries

    def fits(n_t, c_t, hw_t):
        return n_t * c_t * hw_t * eff_bytes <= block_budget

    c_opts = _aligned_divisors(C, 8)
    hw_opts = _aligned_divisors(HWp, 128)
    # Keep at least two channel tiles when possible so v7x's megacore can
    # shard the "parallel" channel axis across both TensorCores.
    c_cap = (C // 2) if len(c_opts) > 1 else C
    alias = {0: 0} if donate_input else {}

    # ---------------- Fused single-read fast path ---------------------------
    if fits(N, c_opts[0], HWp):
        c_tile = c_opts[0]
        for c in c_opts:
            if c <= c_cap and fits(N, c, HWp):
                c_tile = c
        num_c = C // c_tile

        x_spec = pl.BlockSpec((N, c_tile, HWp), lambda c: (0, c, 0))
        cvec_spec = pl.BlockSpec((c_tile, 1), lambda c: (c, 0))
        kernel = functools.partial(_fused_kernel, count=count, hw_real=HW, eps=eps)

        y = pl.pallas_call(
            kernel,
            out_shape=jax.ShapeDtypeStruct((N, C, HWp), dtype),
            grid_spec=pltpu.PrefetchScalarGridSpec(
                num_scalar_prefetch=0,
                grid=(num_c,),
                in_specs=[x_spec, cvec_spec, cvec_spec],
                out_specs=x_spec),
            compiler_params=pltpu.CompilerParams(
                dimension_semantics=("parallel",),
                vmem_limit_bytes=vmem_limit),
            cost_estimate=pl.CostEstimate(
                flops=8 * N * C * HWp, transcendentals=C,
                bytes_accessed=2 * N * C * HWp * elem_bytes),
            input_output_aliases=alias,
        )(x, w2, b2)

    # ---------------- Two-pass (stats scan + normalize) ---------------------
    else:
        n_tile, c_tile, hw_tile = 1, c_opts[0], hw_opts[0]
        for hw in hw_opts:                         # lane-dense first
            if fits(n_tile, c_tile, hw):
                hw_tile = hw
        for c in c_opts:
            if c <= c_cap and fits(n_tile, c, hw_tile):
                c_tile = c
        for n in range(1, N + 1):
            if N % n == 0 and fits(n, c_tile, hw_tile):
                n_tile = n
        num_c, num_n, num_r = C // c_tile, N // n_tile, HWp // hw_tile

        x_spec = pl.BlockSpec((n_tile, c_tile, hw_tile), lambda c, n, r: (n, c, r))
        cvec_spec = pl.BlockSpec((c_tile, 1), lambda c, n, r: (c, 0))

        # Pass 1: per-channel sum / sum-of-squares (single scan of x).
        s, ss = pl.pallas_call(
            _stats_kernel,
            out_shape=(jax.ShapeDtypeStruct((C, 1), jnp.float32),
                       jax.ShapeDtypeStruct((C, 1), jnp.float32)),
            grid_spec=pltpu.PrefetchScalarGridSpec(
                num_scalar_prefetch=0,
                grid=(num_c, num_n, num_r),        # reduction axes last
                in_specs=[x_spec],
                out_specs=(cvec_spec, cvec_spec)),
            compiler_params=pltpu.CompilerParams(
                dimension_semantics=("parallel", "arbitrary", "arbitrary"),
                vmem_limit_bytes=vmem_limit),
            cost_estimate=pl.CostEstimate(
                flops=3 * N * C * HWp, transcendentals=0,
                bytes_accessed=N * C * HWp * elem_bytes + 8 * C),
        )(x)

        # Pass 2: finalize stats per channel tile in-kernel + normalize.
        compute_dtype = _compute_dtype_for(dtype)
        kernel = functools.partial(_norm_kernel, count=count, eps=eps,
                                   compute_dtype=compute_dtype)
        y = pl.pallas_call(
            kernel,
            out_shape=jax.ShapeDtypeStruct((N, C, HWp), dtype),
            grid_spec=pltpu.PrefetchScalarGridSpec(
                num_scalar_prefetch=0,
                grid=(num_c, num_n, num_r),
                in_specs=[x_spec, cvec_spec, cvec_spec, cvec_spec, cvec_spec],
                out_specs=x_spec),
            compiler_params=pltpu.CompilerParams(
                dimension_semantics=("parallel", "parallel", "parallel"),
                vmem_limit_bytes=vmem_limit),
            cost_estimate=pl.CostEstimate(
                flops=2 * N * C * HWp, transcendentals=C,
                bytes_accessed=2 * N * C * HWp * elem_bytes + 16 * C),
            input_output_aliases=alias,
        )(x, s, ss, w2, b2)

    if HWp != HW:
        y = y[..., :HW]
    return y.reshape(N, C, H, W)


# ----------------------------------------------------------------------------
# Reference + test
# ----------------------------------------------------------------------------
def _reference(x, weight, bias, eps=EPS):
    x = x.astype(jnp.float32)
    mean = jnp.mean(x, axis=(0, 2, 3), keepdims=True)
    var = jnp.mean((x - mean) ** 2, axis=(0, 2, 3), keepdims=True)
    return (x - mean) / jnp.sqrt(var + eps) * weight[None, :, None, None] + \
        bias[None, :, None, None]


if __name__ == "__main__":
    root = jax.random.PRNGKey(0)

    # (shape, input dtype, forced per-block budget, atol, rtol)
    cases = [
        ((2, 4, 16, 16), jnp.float32, None, 1e-4, 1e-4),        # fused fast path
        ((2, 16, 7, 7), jnp.float32, None, 1e-4, 1e-4),         # HW=49 padded to 128
        ((2, 16, 16, 16), jnp.float32, 16 * 1024, 1e-4, 1e-4),  # forced two-pass, 3-D grid
        ((2, 16, 16, 16), jnp.bfloat16, 16 * 1024, 5e-2, 5e-2), # bf16 two-pass
    ]

    for i, (shape, dtype, mbb, atol, rtol) in enumerate(cases):
        kx, kw, kb = jax.random.split(jax.random.fold_in(root, i), 3)
        N, C, H, W = shape
        x = jax.random.normal(kx, shape, dtype=jnp.float32)
        weight = 1.0 + 0.1 * jax.random.normal(kw, (C,), dtype=jnp.float32)
        bias = 0.1 * jax.random.normal(kb, (C,), dtype=jnp.float32)

        x_in = x.astype(dtype)
        y = batch_tsa_up_forward(x_in, weight, bias, max_block_bytes=mbb)
        jax.block_until_ready(y)

        y_ref = _reference(x_in, weight, bias)
        assert y.shape == shape
        err = jnp.max(jnp.abs(y.astype(jnp.float32) - y_ref))
        assert jnp.allclose(y.astype(jnp.float32), y_ref, atol=atol, rtol=rtol), \
            f"case {i} mismatch, max abs err = {err}"

    # TODO(synk): relu / a_bn / alpha_norm exist in __init__ but are unused in
    # forward(), so they are intentionally not part of the kernel.
    print("KERNEL_OK")
</pallas_src>

<mosaic_0001>
module attributes {stable_mosaic.version = 11 : i64} {
  func.func @_fused_kernel(%arg0: i32, %arg1: memref<2x4x256xf32, #tpu.memory_space<vmem>>, %arg2: memref<4x1xf32, #tpu.memory_space<vmem>>, %arg3: memref<4x1xf32, #tpu.memory_space<vmem>>, %arg4: memref<2x4x256xf32, #tpu.memory_space<vmem>>) attributes {dimension_semantics = [#tpu.dimension_semantics<parallel>], iteration_bounds = array<i64: 1>, scalar_prefetch = 0 : i64, scratch_operands = 0 : i64, tpu.core_type = #tpu.core_type<tc>, window_params = [{transform_indices = @transform_0, window_bounds = array<i64: 2, 4, 256>}, {transform_indices = @transform_1, window_bounds = array<i64: 4, 1>}, {transform_indices = @transform_2, window_bounds = array<i64: 4, 1>}, {transform_indices = @transform_3, window_bounds = array<i64: 2, 4, 256>}]} {
    %c0 = arith.constant 0 : index
    %c0_0 = arith.constant 0 : index
    %c0_1 = arith.constant 0 : index
    %0 = vector.load %arg1[%c0, %c0_0, %c0_1] : memref<2x4x256xf32, #tpu.memory_space<vmem>>, vector<2x4x256xf32>
    %cst = arith.constant dense<0.000000e+00> : vector<2x4xf32>
    %1 = vector.multi_reduction <add>, %0, %cst [2] : vector<2x4x256xf32> to vector<2x4xf32>
    %2 = vector.shape_cast %1 : vector<2x4xf32> to vector<2x4x1xf32>
    %cst_2 = arith.constant dense<0.000000e+00> : vector<4x1xf32>
    %3 = vector.multi_reduction <add>, %2, %cst_2 [0] : vector<2x4x1xf32> to vector<4x1xf32>
    %cst_3 = arith.constant 0.001953125 : f32
    %4 = vector.broadcast %cst_3 : f32 to vector<4x1xf32>
    %5 = arith.mulf %3, %4 : vector<4x1xf32>
    %6 = vector.shape_cast %5 : vector<4x1xf32> to vector<1x4x1xf32>
    %7 = vector.broadcast %6 : vector<1x4x1xf32> to vector<2x4x256xf32>
    %8 = arith.subf %0, %7 : vector<2x4x256xf32>
    %9 = arith.mulf %8, %8 : vector<2x4x256xf32>
    %cst_4 = arith.constant dense<0.000000e+00> : vector<2x4xf32>
    %10 = vector.multi_reduction <add>, %9, %cst_4 [2] : vector<2x4x256xf32> to vector<2x4xf32>
    %11 = vector.shape_cast %10 : vector<2x4xf32> to vector<2x4x1xf32>
    %cst_5 = arith.constant dense<0.000000e+00> : vector<4x1xf32>
    %12 = vector.multi_reduction <add>, %11, %cst_5 [0] : vector<2x4x1xf32> to vector<4x1xf32>
    %cst_6 = arith.constant 0.001953125 : f32
    %13 = vector.broadcast %cst_6 : f32 to vector<4x1xf32>
    %14 = arith.mulf %12, %13 : vector<4x1xf32>
    %cst_7 = arith.constant 9.99999974E-6 : f32
    %15 = vector.broadcast %cst_7 : f32 to vector<4x1xf32>
    %16 = arith.addf %14, %15 : vector<4x1xf32>
    %17 = math.rsqrt %16 : vector<4x1xf32>
    %c0_8 = arith.constant 0 : index
    %c0_9 = arith.constant 0 : index
    %18 = vector.load %arg2[%c0_8, %c0_9] : memref<4x1xf32, #tpu.memory_space<vmem>>, vector<4x1xf32>
    %19 = arith.mulf %18, %17 : vector<4x1xf32>
    %c0_10 = arith.constant 0 : index
    %c0_11 = arith.constant 0 : index
    %20 = vector.load %arg3[%c0_10, %c0_11] : memref<4x1xf32, #tpu.memory_space<vmem>>, vector<4x1xf32>
    %21 = arith.mulf %5, %19 : vector<4x1xf32>
    %22 = arith.subf %20, %21 : vector<4x1xf32>
    %23 = vector.shape_cast %19 : vector<4x1xf32> to vector<1x4x1xf32>
    %24 = vector.broadcast %23 : vector<1x4x1xf32> to vector<2x4x256xf32>
    %25 = arith.mulf %0, %24 : vector<2x4x256xf32>
    %26 = vector.shape_cast %22 : vector<4x1xf32> to vector<1x4x1xf32>
    %27 = vector.broadcast %26 : vector<1x4x1xf32> to vector<2x4x256xf32>
    %28 = arith.addf %25, %27 : vector<2x4x256xf32>
    %c0_12 = arith.constant 0 : index
    %c0_13 = arith.constant 0 : index
    %c0_14 = arith.constant 0 : index
    %29 = vector.load %arg4[%c0_12, %c0_13, %c0_14] : memref<2x4x256xf32, #tpu.memory_space<vmem>>, vector<2x4x256xf32>
    tpu.vector_store %arg4[%c0_12, %c0_13, %c0_14], %28 {strides = array<i32>} : memref<2x4x256xf32, #tpu.memory_space<vmem>>, vector<2x4x256xf32>,
    return
  }
  func.func @transform_0(%arg0: i32) -> (i32, i32, i32) {
    %c0_i32 = arith.constant 0 : i32
    %c0_i32_0 = arith.constant 0 : i32
    %c0_i32_1 = arith.constant 0 : i32
    return %c0_i32, %arg0, %c0_i32_0 : i32, i32, i32
  }
  func.func @transform_1(%arg0: i32) -> (i32, i32) {
    %c0_i32 = arith.constant 0 : i32
    %c0_i32_0 = arith.constant 0 : i32
    return %arg0, %c0_i32 : i32, i32
  }
  func.func @transform_2(%arg0: i32) -> (i32, i32) {
    %c0_i32 = arith.constant 0 : i32
    %c0_i32_0 = arith.constant 0 : i32
    return %arg0, %c0_i32 : i32, i32
  }
  func.func @transform_3(%arg0: i32) -> (i32, i32, i32) {
    %c0_i32 = arith.constant 0 : i32
    %c0_i32_0 = arith.constant 0 : i32
    %c0_i32_1 = arith.constant 0 : i32
    return %c0_i32, %arg0, %c0_i32_0 : i32, i32, i32
  }
}

</mosaic_0001>

<llo_original>
// kernel: tpu_custom_call.1
$region0: #{tpu_custom_call.1}
  #allocation0 [shape = 'u32[]', space=smem, size = 0x4, offset = 0x4, fixed_abs, tag = 'smem constant byte address 0x4 - core index']
  #allocation1 [shape = 'u32[144,128]{1,0:T(1,128)}', space=vmem, size = 0x12000, scoped, tag = 'internal scratch']
  %s0 = inlined_call_operand.hbm [shape: f32[2,4,256], index: 0, kind: input, shape index: {}]
  %s1 = inlined_call_operand.vmem [shape: f32[4,1], index: 1, kind: input, shape index: {}]
  %s2 = inlined_call_operand.vmem [shape: f32[4,1], index: 2, kind: input, shape index: {}]
  %s3 = inlined_call_operand.hbm [shape: f32[2,4,256], index: 3, kind: output, shape index: {}]
  %s4 = sld [smem:[#allocation0]]
  $region26: #{tpu_custom_call.1} parent=0
    _
  %s6 = ssub.s32 1, %s4
  %s7 = scalar_select 0, %s6, %s4
  $region1: #{tpu_custom_call.1} parent=0
    #allocation2 [shape = 'u8[8192]{0}', space=vmem, size = 0x2000, scoped, tag = 'input window, operand 0, single buffered']
    #allocation3 [shape = 's32[1]{0}', space=sflag, size = 0x4, scoped, tag = 'scoped memory for tpu_custom_call.1']
    #allocation4 [shape = 's32[1]{0}', space=sflag, size = 0x4, scoped, tag = 'scoped memory for tpu_custom_call.1']
    #allocation5 [shape = 'u8[8192]{0}', space=vmem, size = 0x2000, scoped, tag = 'output window, operand 0, single buffered']
    %8 = vsyncpa [#allocation3], 0
    %9 = vsyncpa [#allocation4], 0
    // Predicated region
    $region2: #{tpu_custom_call.1} parent=1 // pred_check
      _
    $region3: #{tpu_custom_call.1} parent=1 // pred_check_branch
      %11 = sbr.rel (0) target = $region5
    $region4: #{tpu_custom_call.1} parent=1 // pred_region
      %s13 = ssub.s32 256, 256
      %14 = vsyncadd [#allocation3], %s13
      %s15 = sshll.u32 [#allocation2], 4
      %s16 = int_to_ptr.vmem [resolvable:$true] %s15
      %21 = dma.hbm_to_vmem [thread:$0]  %s0, 256, %s16, [#allocation3], 128, 128, 8
    $region5: #{tpu_custom_call.1} parent=1 // pred_fallthru
      _
    // Predicated region
    $region6: #{tpu_custom_call.1} parent=1 // pred_check
      _
    $region7: #{tpu_custom_call.1} parent=1 // pred_check_branch
      %23 = sbr.rel (0) target = $region9
    $region8: #{tpu_custom_call.1} parent=1 // pred_region
      _
    $region9: #{tpu_custom_call.1} parent=1 // pred_fallthru
      _
    // Predicated region
    $region10: #{tpu_custom_call.1} parent=1 // pred_check
      _
    $region11: #{tpu_custom_call.1} parent=1 // pred_check_branch
      %25 = sbr.rel (0) target = $region13
    $region12: #{tpu_custom_call.1} parent=1 // pred_region
      _
    $region13: #{tpu_custom_call.1} parent=1 // pred_fallthru
      _
    // Predicated region
    $region14: #{tpu_custom_call.1} parent=1 // pred_check
      _
    $region15: #{tpu_custom_call.1} parent=1 // pred_check_branch
      %27 = sbr.rel (0) target = $region17
    $region16: #{tpu_custom_call.1} parent=1 // pred_region
      %28 = dma.done [#allocation3], 256
    $region17: #{tpu_custom_call.1} parent=1 // pred_fallthru
      _
    %v29 = vld [vmem:[#allocation2] sm:$0xff]
    %v30 = vld [vmem:[#allocation2 + $0x8] sm:$0xff]
    %v33 = vcombine.high %v29, %v29
    %v34 = vcombine.high %v30, %v30
    %vm37 = vcmask 1043456
    %v38 = vsel %vm37, %v29, 0.0
    %v39 = vsel %vm37, %v33, 0.0
    %v40 = vadd.f32 %v38, %v39
    %41 = vadd.xlane.f32.xlu0 %v40
    %v42 = vpop.xlane.xlu0 %41
    %v43 = vsel %vm37, %v30, 0.0
    %v44 = vsel %vm37, %v34, 0.0
    %v45 = vadd.f32 %v43, %v44
    %46 = vadd.xlane.f32.xlu0 %v45
    %v47 = vpop.xlane.xlu0 %46
    %v48 = vsel %vm37, %v42, 0.0
    %v49 = vsel %vm37, %v47, 0.0
    %v50 = vadd.f32 %v48, %v49
    %v51 = vmul.f32 %v50, 0.001953125
    %v54 = vunpack.c.l.s4 839922192
    %v55 = vunpack.c.0.s8 %v54
    %v56 = vlaneseq
    %v57 = vshrl.u32 %v56, 7
    %v58 = vsub.s32 %v55, %v57
    %v59 = vrot.slane %v51, %v58
    %v61 = vsub.f32 %v29, %v59
    %v62 = vsub.f32 %v30, %v59
    %v63 = vmul.f32 %v61, %v61
    %v64 = vmul.f32 %v62, %v62
    %v67 = vcombine.high %v63, %v63
    %v68 = vcombine.high %v64, %v64
    %v71 = vsel %vm37, %v63, 0.0
    %v72 = vsel %vm37, %v67, 0.0
    %v73 = vadd.f32 %v71, %v72
    %74 = vadd.xlane.f32.xlu0 %v73
    %v75 = vpop.xlane.xlu0 %74
    %v76 = vsel %vm37, %v64, 0.0
    %v77 = vsel %vm37, %v68, 0.0
    %v78 = vadd.f32 %v76, %v77
    %79 = vadd.xlane.f32.xlu0 %v78
    %v80 = vpop.xlane.xlu0 %79
    %v81 = vsel %vm37, %v75, 0.0
    %v82 = vsel %vm37, %v80, 0.0
    %v83 = vadd.f32 %v81, %v82
    %v84 = vmul.f32 %v83, 0.001953125
    %v85 = vadd.f32 %v84, 1e-05
    %v86 = vrsqrt.pop %v85
    %v87 = vld [vmem:[%s1] sm:$0xf]
    %v88 = vmul.f32 %v87, %v86
    %v89 = vld [vmem:[%s2] sm:$0xf]
    %v90 = vmul.f32 %v51, %v88
    %v91 = vsub.f32 %v89, %v90
    %93 = vset.pattern.permute.xlu0 0
    %94 = vperm.xlu0 %93, %v88
    %v95 = vpop.permute.xlu0 %94
    %v97 = vunpack.c.l.s4 839922192
    %v98 = vunpack.c.0.s8 %v97
    %v99 = vlaneseq
    %v100 = vshrl.u32 %v99, 7
    %v101 = vsub.s32 %v98, %v100
    %v102 = vrot.slane %v95, %v101
    %v104 = vmul.f32 %v29, %v102
    %v105 = vmul.f32 %v30, %v102
    %107 = vset.pattern.permute.xlu0 0
    %108 = vperm.xlu0 %107, %v91
    %v109 = vpop.permute.xlu0 %108
    %v111 = vunpack.c.l.s4 839922192
    %v112 = vunpack.c.0.s8 %v111
    %v113 = vlaneseq
    %v114 = vshrl.u32 %v113, 7
    %v115 = vsub.s32 %v112, %v114
    %v116 = vrot.slane %v109, %v115
    %v118 = vadd.f32 %v104, %v116
    %v119 = vadd.f32 %v105, %v116
    %120 = vst [vmem:[#allocation5] sm:$0xff] %v118
    %121 = vst [vmem:[#allocation5 + $0x8] sm:$0xff] %v119
    // Predicated region
    $region18: #{tpu_custom_call.1} parent=1 // pred_check
      _
    $region19: #{tpu_custom_call.1} parent=1 // pred_check_branch
      %123 = sbr.rel (0) target = $region21
    $region20: #{tpu_custom_call.1} parent=1 // pred_region
      %s125 = ssub.s32 256, 256
      %126 = vsyncadd [#allocation4], %s125
      %s127 = sshll.u32 [#allocation5], 4
      %s128 = int_to_ptr.vmem [resolvable:$true] %s127
      %133 = dma.vmem_to_hbm [thread:$0]  %s128, 256, %s3, [#allocation4], 128, 128, 8
    $region21: #{tpu_custom_call.1} parent=1 // pred_fallthru
      _
    // Predicated region
    $region22: #{tpu_custom_call.1} parent=1 // pred_check
      _
    $region23: #{tpu_custom_call.1} parent=1 // pred_check_branch
      %135 = sbr.rel (0) target = $region25
    $region24: #{tpu_custom_call.1} parent=1 // pred_region
      %136 = dma.done [#allocation4], 256
    $region25: #{tpu_custom_call.1} parent=1 // pred_fallthru
      _
    %137 = vsyncpa [#allocation3], 1
    %138 = vsyncpa [#allocation4], 1

</llo_original>
